<compile_context>
chip_gen: v5e
topology: v5e:2x2
jax: 0.10.0
libtpu: 0.0.40
codegen_flags: <defaults>
</compile_context>

<pallas_src>
import functools

import jax
import jax.numpy as jnp
from jax.experimental import pallas as pl
from jax.experimental.pallas import tpu as pltpu


def _nll_kernel(logits_ref, tgt_ref, out_ref, *, hw, tile_hw, need_mask):
    """One (sample-block i, spatial-tile j) grid step.

    logits_ref : (bn, C, T)   classes on sublanes, spatial positions on lanes
    tgt_ref    : (bn, 1, T)   int32 target class per spatial position
    out_ref    : (bn, 1, 1, 1) per-(sample, tile) partial NLL sum
    """
    j = pl.program_id(1)

    x = logits_ref[...]                               # (bn, C, T) input dtype
    tgt = tgt_ref[...]                                # (bn, 1, T) int32
    bn, c, t = x.shape

    # Numerically stable log-sum-exp over the class (sublane) axis.
    # Keep max / subtract in the input dtype (bf16 VALU on v6e/v7x); cast only the
    # shifted values to f32 for the exp / sum / log path.
    m = jnp.max(x, axis=1, keepdims=True)                                   # (bn, 1, T)
    e = jnp.exp((x - m).astype(jnp.float32))                                # (bn, C, T) f32
    lse = jnp.log(jnp.sum(e, axis=1)) + jnp.squeeze(m, axis=1).astype(jnp.float32)  # (bn, T)

    # Target-class logit via one-hot select along the class axis (no full logp tensor).
    row = jax.lax.broadcasted_iota(jnp.int32, (bn, c, t), 1)
    picked = jnp.sum(jnp.where(row == tgt, x, jnp.zeros_like(x)), axis=1)   # (bn, T)
    nll = lse - picked.astype(jnp.float32)                                  # (bn, T)

    if need_mask:
        last = pl.num_programs(1) - 1

        @pl.when(j == last)
        def _():
            # Keep the `where` (NOT a mask-multiply): the padded OOB lanes of the last
            # tile may hold Inf/NaN from exp of garbage logits.
            col = jax.lax.broadcasted_iota(jnp.int32, (bn, t), 1) + j * tile_hw
            s = jnp.sum(jnp.where(col < hw, nll, 0.0), axis=-1, keepdims=True)
            out_ref[...] = s[:, :, None, None]

        @pl.when(j != last)
        def _():
            s = jnp.sum(nll, axis=-1, keepdims=True)
            out_ref[...] = s[:, :, None, None]
    else:
        s = jnp.sum(nll, axis=-1, keepdims=True)
        out_ref[...] = s[:, :, None, None]


def criterion_ce_loss(output, target):
    """output: (N, C, H, W) float, target: (N, H, W) int -> scalar mean NLL loss.

    Equivalent to nn.NLLLoss()(F.log_softmax(output, dim=1), target) with
    weight=None and reduction='mean'.
    """
    n, c, h, w = output.shape
    hw = h * w
    itemsize = jnp.dtype(output.dtype).itemsize

    # Free reshapes only — keep the native NCHW layout (no extra HBM transpose pass).
    logits = output.reshape(n, c, hw)
    tgt = target.reshape(n, 1, hw).astype(jnp.int32)

    # ---- byte-driven block sizing -------------------------------------------------
    # Per-lane-column VMEM cost (per sample in the block):
    #   2x double-buffered logits (input dtype, classes padded to 8 sublanes)
    # + ~3x (C,T) f32 in-kernel temporaries (exp, one-hot product, shifted copy)
    # + 2x double-buffered int32 targets (1 row padded to 8 sublanes).
    c_pad = -(-c // 8) * 8
    per_col = c_pad * (2 * itemsize + 3 * 4) + 2 * 8 * 4
    budget = 32 << 20  # keep the estimated footprint well under the scoped-VMEM limit

    tile_hw_target = max(128, min(65536, (budget // per_col) // 128 * 128))
    if hw <= tile_hw_target:
        # Whole spatial dim in one block (full-dim blocks need no 128 alignment);
        # batch several samples per grid step so tiny feature maps still move MiB-scale
        # blocks per DMA instead of a few KiB.
        tile_hw = hw
        num_tiles = 1
        bn = max(1, min(n, budget // max(1, per_col * hw)))
        while n % bn:
            bn -= 1
    else:
        tile_hw = tile_hw_target
        num_tiles = pl.cdiv(hw, tile_hw)
        bn = 1
    need_mask = (hw % tile_hw) != 0

    vmem_bytes = bn * tile_hw * per_col + (6 << 20)
    vmem_limit = int(min(46 << 20, max(16 << 20, vmem_bytes)))

    kernel = functools.partial(
        _nll_kernel, hw=hw, tile_hw=tile_hw, need_mask=need_mask
    )

    # Per-(sample, tile) partial sums; final tiny reduction + mean in the wrapper.
    partial = pl.pallas_call(
        kernel,
        out_shape=jax.ShapeDtypeStruct((n, num_tiles, 1, 1), jnp.float32),
        grid_spec=pltpu.PrefetchScalarGridSpec(
            num_scalar_prefetch=0,
            grid=(n // bn, num_tiles),
            in_specs=[
                pl.BlockSpec((bn, c, tile_hw), lambda i, j: (i, 0, j)),
                pl.BlockSpec((bn, 1, tile_hw), lambda i, j: (i, 0, j)),
            ],
            out_specs=pl.BlockSpec((bn, 1, 1, 1), lambda i, j: (i, j, 0, 0)),
        ),
        compiler_params=pltpu.CompilerParams(
            dimension_semantics=("parallel", "parallel"),
            vmem_limit_bytes=vmem_limit,
        ),
    )(logits, tgt)

    return jnp.sum(partial) / jnp.float32(n * hw)


def _reference_loss(output, target):
    logits = jnp.transpose(output, (0, 2, 3, 1)).astype(jnp.float32)
    logp = jax.nn.log_softmax(logits, axis=-1)
    picked = jnp.take_along_axis(logp, target[..., None].astype(jnp.int32), axis=-1)
    return -jnp.mean(picked)


if __name__ == "__main__":
    key = jax.random.PRNGKey(0)
    k1, k2 = jax.random.split(key)

    N, C, H, W = 2, 4, 16, 16
    output = jax.random.normal(k1, (N, C, H, W), dtype=jnp.float32)
    target = jax.random.randint(k2, (N, H, W), 0, C, dtype=jnp.int32)

    loss = jax.block_until_ready(criterion_ce_loss(output, target))
    ref = jax.block_until_ready(_reference_loss(output, target))
    assert jnp.allclose(loss, ref, rtol=1e-5, atol=1e-5), (loss, ref)

    print("KERNEL_OK")
</pallas_src>

<mosaic_0001>
module attributes {stable_mosaic.version = 11 : i64} {
  func.func @_nll_kernel(%arg0: i32, %arg1: i32, %arg2: memref<2x4x256xf32, #tpu.memory_space<vmem>>, %arg3: memref<2x1x256xi32, #tpu.memory_space<vmem>>, %arg4: memref<2x1x1x1xf32, #tpu.memory_space<vmem>>) attributes {dimension_semantics = [#tpu.dimension_semantics<parallel>, #tpu.dimension_semantics<parallel>], iteration_bounds = array<i64: 1, 1>, scalar_prefetch = 0 : i64, scratch_operands = 0 : i64, tpu.core_type = #tpu.core_type<tc>, window_params = [{transform_indices = @transform_0, window_bounds = array<i64: 2, 4, 256>}, {transform_indices = @transform_1, window_bounds = array<i64: 2, 1, 256>}, {transform_indices = @transform_2, window_bounds = array<i64: 2, 1, 1, 1>}]} {
    %c0 = arith.constant 0 : index
    %c0_0 = arith.constant 0 : index
    %c0_1 = arith.constant 0 : index
    %0 = vector.load %arg2[%c0, %c0_0, %c0_1] : memref<2x4x256xf32, #tpu.memory_space<vmem>>, vector<2x4x256xf32>
    %c0_2 = arith.constant 0 : index
    %c0_3 = arith.constant 0 : index
    %c0_4 = arith.constant 0 : index
    %1 = vector.load %arg3[%c0_2, %c0_3, %c0_4] : memref<2x1x256xi32, #tpu.memory_space<vmem>>, vector<2x1x256xi32>
    %cst = arith.constant dense<0xFF800000> : vector<2x256xf32>
    %2 = vector.multi_reduction <maximumf>, %0, %cst [1] : vector<2x4x256xf32> to vector<2x256xf32>
    %3 = vector.shape_cast %2 : vector<2x256xf32> to vector<2x1x256xf32>
    %4 = vector.broadcast %3 : vector<2x1x256xf32> to vector<2x4x256xf32>
    %5 = arith.subf %0, %4 : vector<2x4x256xf32>
    %6 = math.exp %5 : vector<2x4x256xf32>
    %cst_5 = arith.constant dense<0.000000e+00> : vector<2x256xf32>
    %7 = vector.multi_reduction <add>, %6, %cst_5 [1] : vector<2x4x256xf32> to vector<2x256xf32>
    %8 = math.log %7 : vector<2x256xf32>
    %9 = vector.shape_cast %3 : vector<2x1x256xf32> to vector<2x256xf32>
    %10 = arith.addf %8, %9 : vector<2x256xf32>
    %11 = tpu.iota {dimensions = array<i32: 1>} : vector<2x4x256xi32>
    %12 = vector.broadcast %1 : vector<2x1x256xi32> to vector<2x4x256xi32>
    %13 = arith.cmpi eq, %11, %12 : vector<2x4x256xi32>
    %cst_6 = arith.constant 0.000000e+00 : f32
    %14 = vector.broadcast %cst_6 : f32 to vector<2x4x256xf32>
    %15 = arith.select %13, %0, %14 : vector<2x4x256xi1>, vector<2x4x256xf32>
    %cst_7 = arith.constant dense<0.000000e+00> : vector<2x256xf32>
    %16 = vector.multi_reduction <add>, %15, %cst_7 [1] : vector<2x4x256xf32> to vector<2x256xf32>
    %17 = arith.subf %10, %16 : vector<2x256xf32>
    %cst_8 = arith.constant dense<0.000000e+00> : vector<2xf32>
    %18 = vector.multi_reduction <add>, %17, %cst_8 [1] : vector<2x256xf32> to vector<2xf32>
    %19 = vector.shape_cast %18 : vector<2xf32> to vector<2x1xf32>
    %20 = vector.shape_cast %19 : vector<2x1xf32> to vector<2x1x1x1xf32>
    %c0_9 = arith.constant 0 : index
    %c0_10 = arith.constant 0 : index
    %c0_11 = arith.constant 0 : index
    %c0_12 = arith.constant 0 : index
    %21 = vector.load %arg4[%c0_9, %c0_10, %c0_11, %c0_12] : memref<2x1x1x1xf32, #tpu.memory_space<vmem>>, vector<2x1x1x1xf32>
    tpu.vector_store %arg4[%c0_9, %c0_10, %c0_11, %c0_12], %20 {strides = array<i32>} : memref<2x1x1x1xf32, #tpu.memory_space<vmem>>, vector<2x1x1x1xf32>,
    return
  }
  func.func @transform_0(%arg0: i32, %arg1: i32) -> (i32, i32, i32) {
    %c0_i32 = arith.constant 0 : i32
    %c0_i32_0 = arith.constant 0 : i32
    return %arg0, %c0_i32, %arg1 : i32, i32, i32
  }
  func.func @transform_1(%arg0: i32, %arg1: i32) -> (i32, i32, i32) {
    %c0_i32 = arith.constant 0 : i32
    %c0_i32_0 = arith.constant 0 : i32
    return %arg0, %c0_i32, %arg1 : i32, i32, i32
  }
  func.func @transform_2(%arg0: i32, %arg1: i32) -> (i32, i32, i32, i32) {
    %c0_i32 = arith.constant 0 : i32
    %c0_i32_0 = arith.constant 0 : i32
    %c0_i32_1 = arith.constant 0 : i32
    return %arg0, %arg1, %c0_i32, %c0_i32_0 : i32, i32, i32, i32
  }
}

</mosaic_0001>

<llo_original>
// kernel: tpu_custom_call.1
$region0: #{tpu_custom_call.1}
  #allocation0 [shape = 'u32[]', space=smem, size = 0x4, offset = 0x4, fixed_abs, tag = 'smem constant byte address 0x4 - core index']
  #allocation1 [shape = 'u32[72,128]{1,0:T(1,128)}', space=vmem, size = 0x9000, scoped, tag = 'internal scratch']
  %s0 = inlined_call_operand.hbm [shape: f32[2,4,256], index: 0, kind: input, shape index: {}]
  %s1 = inlined_call_operand.hbm [shape: s32[2,1,256], index: 1, kind: input, shape index: {}]
  %s2 = inlined_call_operand.vmem [shape: f32[2,1,1,1], index: 2, kind: output, shape index: {}]
  %s3 = sld [smem:[#allocation0]]
  $region26: #{tpu_custom_call.1} parent=0
    _
  %s5 = ssub.s32 1, %s3
  %s6 = scalar_select 0, %s5, %s3
  $region1: #{tpu_custom_call.1} parent=0
    #allocation2 [shape = 'u8[8192]{0}', space=vmem, size = 0x2000, scoped, tag = 'input window, operand 0, single buffered']
    #allocation3 [shape = 's32[1]{0}', space=sflag, size = 0x4, scoped, tag = 'scoped memory for tpu_custom_call.1']
    #allocation4 [shape = 'u8[2048]{0}', space=vmem, size = 0x800, scoped, tag = 'input window, operand 1, single buffered']
    #allocation5 [shape = 's32[1]{0}', space=sflag, size = 0x4, scoped, tag = 'scoped memory for tpu_custom_call.1']
    %7 = vsyncpa [#allocation3], 0
    %8 = vsyncpa [#allocation5], 0
    // Predicated region
    $region2: #{tpu_custom_call.1} parent=1 // pred_check
      _
    $region3: #{tpu_custom_call.1} parent=1 // pred_check_branch
      %10 = sbr.rel (0) target = $region5
    $region4: #{tpu_custom_call.1} parent=1 // pred_region
      %12 = vsyncadd [#allocation3], 0
      %s13 = sshll.u32 %s0, 4
      %s14 = int_to_ptr.hbm [resolvable:$true] %s13
      %s15 = sshll.u32 [#allocation2], 4
      %s16 = int_to_ptr.vmem [resolvable:$true] %s15
      %21 = dma.hbm_to_vmem [thread:$0]  %s14, 256, %s16, [#allocation3], 128, 128, 8
    $region5: #{tpu_custom_call.1} parent=1 // pred_fallthru
      _
    // Predicated region
    $region6: #{tpu_custom_call.1} parent=1 // pred_check
      _
    $region7: #{tpu_custom_call.1} parent=1 // pred_check_branch
      %23 = sbr.rel (0) target = $region9
    $region8: #{tpu_custom_call.1} parent=1 // pred_region
      %25 = vsyncadd [#allocation5], 0
      %s26 = sshll.u32 %s1, 4
      %s27 = int_to_ptr.hbm [resolvable:$true] %s26
      %s28 = sshll.u32 [#allocation4], 4
      %s29 = int_to_ptr.vmem [resolvable:$true] %s28
      %34 = dma.hbm_to_vmem [thread:$0]  %s27, 64, %s29, [#allocation5], 32, 32, 2
    $region9: #{tpu_custom_call.1} parent=1 // pred_fallthru
      _
    // Predicated region
    $region10: #{tpu_custom_call.1} parent=1 // pred_check
      _
    $region11: #{tpu_custom_call.1} parent=1 // pred_check_branch
      %36 = sbr.rel (0) target = $region13
    $region12: #{tpu_custom_call.1} parent=1 // pred_region
      %38 = dma.done [#allocation3], 256
    $region13: #{tpu_custom_call.1} parent=1 // pred_fallthru
      _
    // Predicated region
    $region14: #{tpu_custom_call.1} parent=1 // pred_check
      _
    $region15: #{tpu_custom_call.1} parent=1 // pred_check_branch
      %40 = sbr.rel (0) target = $region17
    $region16: #{tpu_custom_call.1} parent=1 // pred_region
      %42 = dma.done [#allocation5], 64
    $region17: #{tpu_custom_call.1} parent=1 // pred_fallthru
      _
    %v43 = vld [vmem:[#allocation2] sm:$0xff]
    %v44 = vld [vmem:[#allocation2 + $0x8] sm:$0xff]
    %v45 = vld [vmem:[#allocation4] sm:$0x3]
    %v46 = vld [vmem:[#allocation4 + $0x2] sm:$0x3]
    %49 = vst [vmem:[#allocation1] ss:$2 sm:$0xff] %v43
    %v50 = vld.sshfl [vmem:[#allocation1] sm:$0xff pattern:$0x75316420]
    %v51 = vld.sshfl [vmem:[#allocation1 + $0x8] sm:$0xff pattern:$0x75316420]
    %s52 = scalar_lea.vmem [#allocation1], 16
    %53 = vst [vmem:[%s52] ss:$2 sm:$0xff] %v44
    %v54 = vld.sshfl [vmem:[#allocation1 + $0x10] sm:$0xff pattern:$0x75316420]
    %v55 = vld.sshfl [vmem:[#allocation1 + $0x18] sm:$0xff pattern:$0x75316420]
    %vm60 = vcmask 1043456
    %v61 = vsel %vm60, %v50, -inf
    %v62 = vrot.slane %v61, 4
    %v63 = vmax.f32 %v61, %v62
    %v64 = vrot.slane %v63, 2
    %v65 = vmax.f32 %v63, %v64
    %v66 = vrot.slane %v65, 1
    %v67 = vmax.f32 %v65, %v66
    %v68 = vsel %vm60, %v51, -inf
    %v69 = vrot.slane %v68, 4
    %v70 = vmax.f32 %v68, %v69
    %v71 = vrot.slane %v70, 2
    %v72 = vmax.f32 %v70, %v71
    %v73 = vrot.slane %v72, 1
    %v74 = vmax.f32 %v72, %v73
    %v75 = vsel %vm60, %v54, -inf
    %v76 = vrot.slane %v75, 4
    %v77 = vmax.f32 %v75, %v76
    %v78 = vrot.slane %v77, 2
    %v79 = vmax.f32 %v77, %v78
    %v80 = vrot.slane %v79, 1
    %v81 = vmax.f32 %v79, %v80
    %v82 = vsel %vm60, %v55, -inf
    %v83 = vrot.slane %v82, 4
    %v84 = vmax.f32 %v82, %v83
    %v85 = vrot.slane %v84, 2
    %v86 = vmax.f32 %v84, %v85
    %v87 = vrot.slane %v86, 1
    %v88 = vmax.f32 %v86, %v87
    %v93 = vrot.slane %v74, 4
    %v94 = vrot.slane %v88, 4
    %v95 = vsel %vm60, %v67, %v93
    %v96 = vsel %vm60, %v81, %v94
    %v99 = vsub.f32 %v43, %v95
    %v100 = vsub.f32 %v44, %v96
    %v101 = vmul.f32 %v99, 1.442695
    %v102 = vpow.pop %v101
    %v103 = vmul.f32 %v100, 1.442695
    %v104 = vpow.pop %v103
    %107 = vst [vmem:[#allocation1] ss:$2 sm:$0xff] %v102
    %v108 = vld.sshfl [vmem:[#allocation1] sm:$0xff pattern:$0x75316420]
    %v109 = vld.sshfl [vmem:[#allocation1 + $0x8] sm:$0xff pattern:$0x75316420]
    %s110 = scalar_lea.vmem [#allocation1], 16
    %111 = vst [vmem:[%s110] ss:$2 sm:$0xff] %v104
    %v112 = vld.sshfl [vmem:[#allocation1 + $0x10] sm:$0xff pattern:$0x75316420]
    %v113 = vld.sshfl [vmem:[#allocation1 + $0x18] sm:$0xff pattern:$0x75316420]
    %v118 = vsel %vm60, %v108, 0.0
    %v119 = vrot.slane %v118, 4
    %v120 = vadd.f32 %v118, %v119
    %v121 = vrot.slane %v120, 2
    %v122 = vadd.f32 %v120, %v121
    %v123 = vrot.slane %v122, 1
    %v124 = vadd.f32 %v122, %v123
    %v125 = vsel %vm60, %v109, 0.0
    %v126 = vrot.slane %v125, 4
    %v127 = vadd.f32 %v125, %v126
    %v128 = vrot.slane %v127, 2
    %v129 = vadd.f32 %v127, %v128
    %v130 = vrot.slane %v129, 1
    %v131 = vadd.f32 %v129, %v130
    %v132 = vsel %vm60, %v112, 0.0
    %v133 = vrot.slane %v132, 4
    %v134 = vadd.f32 %v132, %v133
    %v135 = vrot.slane %v134, 2
    %v136 = vadd.f32 %v134, %v135
    %v137 = vrot.slane %v136, 1
    %v138 = vadd.f32 %v136, %v137
    %v139 = vsel %vm60, %v113, 0.0
    %v140 = vrot.slane %v139, 4
    %v141 = vadd.f32 %v139, %v140
    %v142 = vrot.slane %v141, 2
    %v143 = vadd.f32 %v141, %v142
    %v144 = vrot.slane %v143, 1
    %v145 = vadd.f32 %v143, %v144
    %v146 = vlog2.pop %v124
    %v147 = vmul.f32 %v146, 0.6931472
    %v148 = vlog2.pop %v131
    %v149 = vmul.f32 %v148, 0.6931472
    %v150 = vlog2.pop %v138
    %v151 = vmul.f32 %v150, 0.6931472
    %v152 = vlog2.pop %v145
    %v153 = vmul.f32 %v152, 0.6931472
    %v154 = vadd.f32 %v147, %v67
    %v155 = vadd.f32 %v149, %v74
    %v156 = vadd.f32 %v151, %v81
    %v157 = vadd.f32 %v153, %v88
    %v158 = vlaneseq
    %v159 = vshrl.u32 %v158, 7
    %v160 = vperm.slane %v45, 0
    %v161 = vperm.slane %v45, 1
    %v162 = vperm.slane %v46, 0
    %v163 = vperm.slane %v46, 1
    %vm164 = vcmp.eq.s32.totalorder %v159, %v160
    %vm165 = vcmp.eq.s32.totalorder %v159, %v161
    %vm166 = vcmp.eq.s32.totalorder %v159, %v162
    %vm167 = vcmp.eq.s32.totalorder %v159, %v163
    %168 = vst [vmem:[#allocation1] ss:$2 sm:$0xff] %v43
    %v169 = vld.sshfl [vmem:[#allocation1] sm:$0xff pattern:$0x75316420]
    %v170 = vld.sshfl [vmem:[#allocation1 + $0x8] sm:$0xff pattern:$0x75316420]
    %s171 = scalar_lea.vmem [#allocation1], 16
    %172 = vst [vmem:[%s171] ss:$2 sm:$0xff] %v44
    %v173 = vld.sshfl [vmem:[#allocation1 + $0x10] sm:$0xff pattern:$0x75316420]
    %v174 = vld.sshfl [vmem:[#allocation1 + $0x18] sm:$0xff pattern:$0x75316420]
    %v179 = vsel %vm164, %v169, 0.0
    %v180 = vsel %vm165, %v170, 0.0
    %v181 = vsel %vm166, %v173, 0.0
    %v182 = vsel %vm167, %v174, 0.0
    %v183 = vsel %vm60, %v179, 0.0
    %v184 = vrot.slane %v183, 4
    %v185 = vadd.f32 %v183, %v184
    %v186 = vrot.slane %v185, 2
    %v187 = vadd.f32 %v185, %v186
    %v188 = vrot.slane %v187, 1
    %v189 = vadd.f32 %v187, %v188
    %v190 = vsel %vm60, %v180, 0.0
    %v191 = vrot.slane %v190, 4
    %v192 = vadd.f32 %v190, %v191
    %v193 = vrot.slane %v192, 2
    %v194 = vadd.f32 %v192, %v193
    %v195 = vrot.slane %v194, 1
    %v196 = vadd.f32 %v194, %v195
    %v197 = vsel %vm60, %v181, 0.0
    %v198 = vrot.slane %v197, 4
    %v199 = vadd.f32 %v197, %v198
    %v200 = vrot.slane %v199, 2
    %v201 = vadd.f32 %v199, %v200
    %v202 = vrot.slane %v201, 1
    %v203 = vadd.f32 %v201, %v202
    %v204 = vsel %vm60, %v182, 0.0
    %v205 = vrot.slane %v204, 4
    %v206 = vadd.f32 %v204, %v205
    %v207 = vrot.slane %v206, 2
    %v208 = vadd.f32 %v206, %v207
    %v209 = vrot.slane %v208, 1
    %v210 = vadd.f32 %v208, %v209
    %v211 = vsub.f32 %v154, %v189
    %v212 = vsub.f32 %v155, %v196
    %v213 = vsub.f32 %v156, %v203
    %v214 = vsub.f32 %v157, %v210
    %vm219 = vcmask 1041409
    %v220 = vsel %vm219, %v213, %v211
    %v221 = vsel %vm219, %v214, %v212
    %vm224 = vcmask 1041408
    %v225 = vsel %vm224, %v220, 0.0
    %v226 = vsel %vm224, %v221, 0.0
    %v227 = vadd.f32 %v225, %v226
    %228 = vadd.xlane.f32.xlu0 %v227
    %v229 = vpop.xlane.xlu0 %228
    %v231 = vperm.slane %v229, 0
    %v232 = vperm.slane %v229, 1
    %vm235 = vcmask 0
    %236 = vst.msk [vmem:[%s2] sm:$0x1] %vm235, %v231
    %237 = vst.msk [vmem:[%s2 + $0x1] sm:$0x1] %vm235, %v232
    // Predicated region
    $region18: #{tpu_custom_call.1} parent=1 // pred_check
      _
    $region19: #{tpu_custom_call.1} parent=1 // pred_check_branch
      %239 = sbr.rel (0) target = $region21
    $region20: #{tpu_custom_call.1} parent=1 // pred_region
      _
    $region21: #{tpu_custom_call.1} parent=1 // pred_fallthru
      _
    // Predicated region
    $region22: #{tpu_custom_call.1} parent=1 // pred_check
      _
    $region23: #{tpu_custom_call.1} parent=1 // pred_check_branch
      %241 = sbr.rel (0) target = $region25
    $region24: #{tpu_custom_call.1} parent=1 // pred_region
      _
    $region25: #{tpu_custom_call.1} parent=1 // pred_fallthru
      _
    %242 = vsyncpa [#allocation3], 1
    %243 = vsyncpa [#allocation5], 1

</llo_original>
